<compile_context>
chip_gen: v5e
topology: v5e:2x2
jax: 0.10.0
libtpu: 0.0.40
codegen_flags: <defaults>
</compile_context>

<pallas_src>
import functools

import numpy as np
import jax
import jax.numpy as jnp
from jax.experimental import pallas as pl
from jax.experimental.pallas import tpu as pltpu


# ------------------------- Pallas kernel (hot path) -------------------------

def _edge_loss_kernel(idx_i_ref, idx_j_ref,       # SMEM scalar-prefetch (unused in body)
                      params_ref,                 # SMEM, flat (E*12,) f32
                      pred_i_ref, pred_j_ref,     # (1, 3, rows_tile, 128) bf16
                      tgt_i_ref, tgt_j_ref,       # (1, 3, rows_tile, 128) bf16
                      wlog_i_ref, wlog_j_ref,     # (1, rows_tile, 128) bf16 (log conf)
                      out_ref,                    # (1, 1, 1) per-edge partial sum
                      *, rows_total, rows_tile):
    del idx_i_ref, idx_j_ref                      # consumed only by the index maps
    e = pl.program_id(0)                          # edge axis (parallel / core-parallel)
    c = pl.program_id(1)                          # pixel-chunk axis (reduction, last)

    base = e * 12                                 # [m00 m01 m02 t0 | m1x t1 | m2x t2]
    m = [params_ref[base + k] for k in range(12)]

    need_mask = (rows_total % rows_tile) != 0
    if need_mask:                                 # ragged last chunk -> zero padded rows
        rows = c * rows_tile + jax.lax.broadcasted_iota(
            jnp.int32, (rows_tile, 128), 0)
        valid = rows < rows_total

    def branch(pred_ref, tgt_ref, wlog_ref):
        px = pred_ref[0, 0].astype(jnp.float32)
        py = pred_ref[0, 1].astype(jnp.float32)
        pz = pred_ref[0, 2].astype(jnp.float32)
        # aligned = M @ p + T  with the adaptor already folded into M
        ax = m[0] * px + m[1] * py + m[2]  * pz + m[3]
        ay = m[4] * px + m[5] * py + m[6]  * pz + m[7]
        az = m[8] * px + m[9] * py + m[10] * pz + m[11]
        dx = tgt_ref[0, 0].astype(jnp.float32) - ax
        dy = tgt_ref[0, 1].astype(jnp.float32) - ay
        dz = tgt_ref[0, 2].astype(jnp.float32) - az
        d = jnp.sqrt(dx * dx + dy * dy + dz * dz)        # L2 over xyz
        w = wlog_ref[0].astype(jnp.float32)              # precomputed log(conf)
        contrib = d * w
        if need_mask:
            contrib = jnp.where(valid, contrib, 0.0)
        return jnp.sum(contrib)                          # one cross-lane reduce (XLU)

    partial = (branch(pred_i_ref, tgt_i_ref, wlog_i_ref)
               + branch(pred_j_ref, tgt_j_ref, wlog_j_ref))

    @pl.when(c == 0)
    def _():
        out_ref[...] = jnp.zeros_like(out_ref)
    out_ref[...] += partial                              # accumulate over pixel chunks


# ------------------------- tiling / device heuristics -------------------------

def _device_defaults():
    kind = ""
    try:
        kind = jax.devices()[0].device_kind.lower()
    except Exception:
        pass
    is_v7 = ("v7" in kind) or ("7x" in kind)
    if is_v7:                       # 64 MiB physical VMEM -> stay well below it
        return 2048, 48 * 1024 * 1024, True
    return 4096, 96 * 1024 * 1024, False   # v5e / v6e: 128 MiB VMEM


def _pick_tiling(n_rows, target_rows):
    """rows_tile is a multiple of 8 (or the full extent); ragged handled by mask."""
    target_rows = max(8, int(target_rows))
    if n_rows <= target_rows:
        return n_rows, 1                      # full-extent block, no mask needed
    rows_tile = max(8, (target_rows // 8) * 8)
    n_chunks = -(-n_rows // rows_tile)        # cdiv
    return rows_tile, n_chunks


# ------------------------- one-time data preparation -------------------------

def prepare_inputs(pts3d, pred_i, pred_j, conf_i, conf_j,
                   stream_dtype=jnp.bfloat16):
    """One-time re-layout, hoisted out of the per-iteration path.

    Returns lane-dense channel planes (., 3, R, 128) for predictions and the
    scene point maps, plus precomputed log-confidence planes (E, R, 128), all
    cast to `stream_dtype` (bf16 halves streamed HBM bytes; upcast in-kernel).
    """
    E, H, W, _ = pred_i.shape
    n_imgs = pts3d.shape[0]
    P = H * W
    assert P % 128 == 0, "pixel axis must be lane-dense (multiple of 128)"
    R = P // 128

    def planes(x, n):   # (n,H,W,3) -> (n,3,R,128)
        return jnp.transpose(x.reshape(n, P, 3), (0, 2, 1)) \
                  .reshape(n, 3, R, 128).astype(stream_dtype)

    wlog_i = jnp.log(conf_i.astype(jnp.float32)).reshape(E, R, 128).astype(stream_dtype)
    wlog_j = jnp.log(conf_j.astype(jnp.float32)).reshape(E, R, 128).astype(stream_dtype)
    return planes(pred_i, E), planes(pred_j, E), planes(pts3d, n_imgs), wlog_i, wlog_j


# ------------------------- forward (per-iteration hot path) -------------------------

def base_optimizer_forward(pose34, adapt3, idx_i, idx_j,
                           pred_i_pl, pred_j_pl, pts_pl, wlog_i, wlog_j,
                           *, target_rows=None, vmem_limit_bytes=None,
                           core_parallel=None):
    """pose34:(E,3,4) adapt3:(E,3) idx_*:(E,) int32
    pred_*_pl:(E,3,R,128) pts_pl:(n_imgs,3,R,128) wlog_*:(E,R,128) -> scalar loss."""
    E = pred_i_pl.shape[0]
    R = pred_i_pl.shape[2]
    P = R * 128

    t_rows, vmem_default, is_v7 = _device_defaults()
    target_rows = t_rows if target_rows is None else target_rows
    vmem_limit_bytes = vmem_default if vmem_limit_bytes is None else vmem_limit_bytes
    core_parallel = is_v7 if core_parallel is None else core_parallel

    rows_tile, C = _pick_tiling(R, target_rows)

    # Fold the per-channel adaptor into the pose: (s*R)@(a*p)+s*T = ((s*R)diag(a))p + s*T
    M = pose34[:, :, :3].astype(jnp.float32) * adapt3.astype(jnp.float32)[:, None, :]
    params = jnp.concatenate([M, pose34[:, :, 3:4].astype(jnp.float32)], axis=-1)
    params = params.reshape(-1)                    # (E*12,) flat f32, SMEM-resident
    # TODO(synk): for very large edge counts, switch to a per-edge (1,12) SMEM
    # BlockSpec so only 12 scalars stay resident instead of the full table.

    pt_self_spec = pl.BlockSpec((1, 3, rows_tile, 128),
                                lambda e, c, ii, jj: (e, 0, c, 0))
    pt_tgt_i_spec = pl.BlockSpec((1, 3, rows_tile, 128),
                                 lambda e, c, ii, jj: (ii[e], 0, c, 0))
    pt_tgt_j_spec = pl.BlockSpec((1, 3, rows_tile, 128),
                                 lambda e, c, ii, jj: (jj[e], 0, c, 0))
    cf_spec = pl.BlockSpec((1, rows_tile, 128),
                           lambda e, c, ii, jj: (e, c, 0))
    # TODO(synk): if a v7x trace shows exposed DMA, add pipeline_mode=pl.Buffered(3).

    grid_spec = pltpu.PrefetchScalarGridSpec(
        num_scalar_prefetch=2,                     # idx_i, idx_j -> SMEM, fed to index maps
        grid=(E, C),
        in_specs=[
            pl.BlockSpec(memory_space=pltpu.MemorySpace.SMEM),   # params (resident)
            pt_self_spec, pt_self_spec,                          # pred_i, pred_j
            pt_tgt_i_spec, pt_tgt_j_spec,                        # pts3d[idx_i], pts3d[idx_j]
            cf_spec, cf_spec,                                    # log-conf i, j
        ],
        out_specs=pl.BlockSpec((1, 1, 1), lambda e, c, ii, jj: (e, 0, 0)),
    )

    edge_sem = pltpu.CORE_PARALLEL if core_parallel else pltpu.PARALLEL
    partials = pl.pallas_call(
        functools.partial(_edge_loss_kernel, rows_total=R, rows_tile=rows_tile),
        grid_spec=grid_spec,
        out_shape=jax.ShapeDtypeStruct((E, 1, 1), jnp.float32),
        compiler_params=pltpu.CompilerParams(
            dimension_semantics=(edge_sem, pltpu.ARBITRARY),
            vmem_limit_bytes=vmem_limit_bytes),
    )(idx_i.astype(jnp.int32), idx_j.astype(jnp.int32), params,
      pred_i_pl, pred_j_pl, pts_pl, pts_pl, wlog_i, wlog_j)

    # li + lj = (per-edge pixel sum) / P ; loss = sum_e (li + lj) / n_edges
    return jnp.sum(partials) / jnp.float32(P * E)


# ------------------------- parameter setup (JAX glue) -------------------------

def signed_expm1(x):
    return jnp.sign(x) * jnp.expm1(jnp.abs(x))


def quat_xyzw_to_rotmat(q):
    x, y, z, w = q[..., 0], q[..., 1], q[..., 2], q[..., 3]
    xx, yy, zz = x * x, y * y, z * z
    xy, xz, yz = x * y, x * z, y * z
    wx, wy, wz = w * x, w * y, w * z
    r0 = jnp.stack([1 - 2 * (yy + zz), 2 * (xy - wz), 2 * (xz + wy)], -1)
    r1 = jnp.stack([2 * (xy + wz), 1 - 2 * (xx + zz), 2 * (yz - wx)], -1)
    r2 = jnp.stack([2 * (xz - wy), 2 * (yz + wx), 1 - 2 * (xx + yy)], -1)
    return jnp.stack([r0, r1, r2], axis=-2)


def build_pw_poses_and_adaptors(key, n_edges, base_scale=0.5, pw_break=20.0):
    # nn.Parameter(rand_pose((n_edges, 1 + POSE_DIM)))  -> randn (E, 8)
    pw_poses = jax.random.normal(key, (n_edges, 8), dtype=jnp.float32)
    # nn.Parameter(torch.zeros((n_edges, 2)))
    pw_adaptors = jnp.zeros((n_edges, 2), jnp.float32)

    # get_pw_norm_scale_factor / get_pw_scale  (norm_pw_scale=True)
    norm_factor = jnp.exp(jnp.log(base_scale) - jnp.mean(pw_poses[:, -1]))
    scale = jnp.exp(pw_poses[:, -1]) * norm_factor

    # _get_poses: unit-quat -> R, signed_expm1 translation; then scale rows
    q = pw_poses[:, :4]
    q = q / jnp.linalg.norm(q, axis=-1, keepdims=True)
    R = quat_xyzw_to_rotmat(q)
    T = signed_expm1(pw_poses[:, 4:7])
    pose34 = jnp.concatenate(
        [scale[:, None, None] * R, (scale[:, None] * T)[:, :, None]], axis=-1)

    # get_adaptors: (xy, xy, z), zero-mean, exp(./pw_break)
    a = jnp.concatenate([pw_adaptors[:, 0:1], pw_adaptors], axis=-1)
    a = a - a.mean(axis=1, keepdims=True)
    adapt3 = jnp.exp(a / pw_break)
    return pose34, adapt3


# ------------------------------------ main ------------------------------------

if __name__ == "__main__":
    key = jax.random.PRNGKey(0)
    n_imgs, H, W = 3, 16, 16
    P = H * W                                   # 256 pixels per view
    edges = [(0, 1), (1, 0), (0, 2), (2, 0), (1, 2), (2, 1)]
    E = len(edges)

    k1, k2, k3, k4, k5, k6 = jax.random.split(key, 6)
    pts3d = jax.random.normal(k1, (n_imgs, H, W, 3), jnp.float32)      # get_pts3d()
    pred_i = jax.random.normal(k2, (E, H, W, 3), jnp.float32)          # edge2pts_i
    pred_j = jax.random.normal(k3, (E, H, W, 3), jnp.float32)          # edge2pts_j
    conf_i = jax.random.uniform(k4, (E, H, W), jnp.float32, 1.0, 4.0)  # edge2conf_i
    conf_j = jax.random.uniform(k5, (E, H, W), jnp.float32, 1.0, 4.0)  # edge2conf_j
    pose34, adapt3 = build_pw_poses_and_adaptors(k6, E)

    idx_i = jnp.array([i for i, _ in edges], jnp.int32)
    idx_j = jnp.array([j for _, j in edges], jnp.int32)

    # One-time re-layout + log-conf + bf16 cast (constant across alignment iters).
    pred_i_pl, pred_j_pl, pts_pl, wlog_i, wlog_j = prepare_inputs(
        pts3d, pred_i, pred_j, conf_i, conf_j)

    loss = base_optimizer_forward(pose34, adapt3, idx_i, idx_j,
                                  pred_i_pl, pred_j_pl, pts_pl, wlog_i, wlog_j)
    loss = jax.block_until_ready(loss)

    # plain-JAX reference of BaseOptimizer.forward (ret_details=False)
    # TODO(synk): ret_details=True per-pair (n_imgs, n_imgs) matrix not materialized.
    def ref_forward(p_i, p_j, pts, wli, wlj):
        M = pose34[:, :, :3] * adapt3[:, None, :]
        T = pose34[:, :, 3]

        def transform(p, Me, Te):     # explicit elementwise (no matmul precision issues)
            ax = p[..., 0] * Me[0, 0] + p[..., 1] * Me[0, 1] + p[..., 2] * Me[0, 2] + Te[0]
            ay = p[..., 0] * Me[1, 0] + p[..., 1] * Me[1, 1] + p[..., 2] * Me[1, 2] + Te[1]
            az = p[..., 0] * Me[2, 0] + p[..., 1] * Me[2, 1] + p[..., 2] * Me[2, 2] + Te[2]
            return jnp.stack([ax, ay, az], axis=-1)

        total = jnp.float32(0.0)
        for e, (i, j) in enumerate(edges):
            ai = transform(p_i[e], M[e], T[e])
            aj = transform(p_j[e], M[e], T[e])
            li = (jnp.linalg.norm(pts[i] - ai, axis=-1) * wli[e]).mean()
            lj = (jnp.linalg.norm(pts[j] - aj, axis=-1) * wlj[e]).mean()
            total = total + li + lj
        return total / E

    # Tight check: same bf16-quantized streams as the kernel, all math in f32.
    q = lambda x: x.astype(jnp.bfloat16).astype(jnp.float32)
    ref_q = jax.block_until_ready(ref_forward(q(pred_i), q(pred_j), q(pts3d),
                                              q(jnp.log(conf_i)), q(jnp.log(conf_j))))
    assert np.allclose(np.asarray(loss), np.asarray(ref_q),
                       rtol=2e-4, atol=1e-5), (loss, ref_q)

    # Sanity check vs the full-f32 reference (bf16 streaming tolerance).
    ref_f32 = jax.block_until_ready(ref_forward(pred_i, pred_j, pts3d,
                                                jnp.log(conf_i), jnp.log(conf_j)))
    assert np.allclose(np.asarray(loss), np.asarray(ref_f32),
                       rtol=5e-2, atol=5e-3), (loss, ref_f32)

    print("KERNEL_OK")
</pallas_src>

<mosaic_0001>
module attributes {stable_mosaic.version = 11 : i64} {
  func.func @_edge_loss_kernel(%arg0: i32, %arg1: i32, %arg2: memref<6xi32, #tpu.memory_space<smem>>, %arg3: memref<6xi32, #tpu.memory_space<smem>>, %arg4: memref<72xf32, #tpu.memory_space<smem>>, %arg5: memref<1x3x2x128xbf16, #tpu.memory_space<vmem>>, %arg6: memref<1x3x2x128xbf16, #tpu.memory_space<vmem>>, %arg7: memref<1x3x2x128xbf16, #tpu.memory_space<vmem>>, %arg8: memref<1x3x2x128xbf16, #tpu.memory_space<vmem>>, %arg9: memref<1x2x128xbf16, #tpu.memory_space<vmem>>, %arg10: memref<1x2x128xbf16, #tpu.memory_space<vmem>>, %arg11: memref<1x1x1xf32, #tpu.memory_space<vmem>>) attributes {dimension_semantics = [#tpu.dimension_semantics<parallel>, #tpu.dimension_semantics<arbitrary>], iteration_bounds = array<i64: 6, 1>, scalar_prefetch = 2 : i64, scratch_operands = 0 : i64, tpu.core_type = #tpu.core_type<tc>, window_params = [{transform_indices = @transform_0, window_bounds = array<i64: 72>}, {transform_indices = @transform_1, window_bounds = array<i64: 1, 3, 2, 128>}, {transform_indices = @transform_2, window_bounds = array<i64: 1, 3, 2, 128>}, {transform_indices = @transform_3, window_bounds = array<i64: 1, 3, 2, 128>}, {transform_indices = @transform_4, window_bounds = array<i64: 1, 3, 2, 128>}, {transform_indices = @transform_5, window_bounds = array<i64: 1, 2, 128>}, {transform_indices = @transform_6, window_bounds = array<i64: 1, 2, 128>}, {transform_indices = @transform_7, window_bounds = array<i64: 1, 1, 1>}]} {
    %c12_i32 = arith.constant 12 : i32
    %0 = arith.muli %arg0, %c12_i32 : i32
    %c0_i32 = arith.constant 0 : i32
    %1 = arith.addi %0, %c0_i32 : i32
    %2 = arith.index_cast %1 : i32 to index
    %3 = memref.load %arg4[%2] : memref<72xf32, #tpu.memory_space<smem>>
    %c1_i32 = arith.constant 1 : i32
    %4 = arith.addi %0, %c1_i32 : i32
    %5 = arith.index_cast %4 : i32 to index
    %6 = memref.load %arg4[%5] : memref<72xf32, #tpu.memory_space<smem>>
    %c2_i32 = arith.constant 2 : i32
    %7 = arith.addi %0, %c2_i32 : i32
    %8 = arith.index_cast %7 : i32 to index
    %9 = memref.load %arg4[%8] : memref<72xf32, #tpu.memory_space<smem>>
    %c3_i32 = arith.constant 3 : i32
    %10 = arith.addi %0, %c3_i32 : i32
    %11 = arith.index_cast %10 : i32 to index
    %12 = memref.load %arg4[%11] : memref<72xf32, #tpu.memory_space<smem>>
    %c4_i32 = arith.constant 4 : i32
    %13 = arith.addi %0, %c4_i32 : i32
    %14 = arith.index_cast %13 : i32 to index
    %15 = memref.load %arg4[%14] : memref<72xf32, #tpu.memory_space<smem>>
    %c5_i32 = arith.constant 5 : i32
    %16 = arith.addi %0, %c5_i32 : i32
    %17 = arith.index_cast %16 : i32 to index
    %18 = memref.load %arg4[%17] : memref<72xf32, #tpu.memory_space<smem>>
    %c6_i32 = arith.constant 6 : i32
    %19 = arith.addi %0, %c6_i32 : i32
    %20 = arith.index_cast %19 : i32 to index
    %21 = memref.load %arg4[%20] : memref<72xf32, #tpu.memory_space<smem>>
    %c7_i32 = arith.constant 7 : i32
    %22 = arith.addi %0, %c7_i32 : i32
    %23 = arith.index_cast %22 : i32 to index
    %24 = memref.load %arg4[%23] : memref<72xf32, #tpu.memory_space<smem>>
    %c8_i32 = arith.constant 8 : i32
    %25 = arith.addi %0, %c8_i32 : i32
    %26 = arith.index_cast %25 : i32 to index
    %27 = memref.load %arg4[%26] : memref<72xf32, #tpu.memory_space<smem>>
    %c9_i32 = arith.constant 9 : i32
    %28 = arith.addi %0, %c9_i32 : i32
    %29 = arith.index_cast %28 : i32 to index
    %30 = memref.load %arg4[%29] : memref<72xf32, #tpu.memory_space<smem>>
    %c10_i32 = arith.constant 10 : i32
    %31 = arith.addi %0, %c10_i32 : i32
    %32 = arith.index_cast %31 : i32 to index
    %33 = memref.load %arg4[%32] : memref<72xf32, #tpu.memory_space<smem>>
    %c11_i32 = arith.constant 11 : i32
    %34 = arith.addi %0, %c11_i32 : i32
    %35 = arith.index_cast %34 : i32 to index
    %36 = memref.load %arg4[%35] : memref<72xf32, #tpu.memory_space<smem>>
    %c0 = arith.constant 0 : index
    %c0_0 = arith.constant 0 : index
    %c0_1 = arith.constant 0 : index
    %c0_2 = arith.constant 0 : index
    %37 = vector.load %arg5[%c0, %c0_0, %c0_1, %c0_2] : memref<1x3x2x128xbf16, #tpu.memory_space<vmem>>, vector<1x1x2x128xbf16>
    %38 = vector.shape_cast %37 : vector<1x1x2x128xbf16> to vector<2x128xbf16>
    %39 = arith.extf %38 : vector<2x128xbf16> to vector<2x128xf32>
    %c0_3 = arith.constant 0 : index
    %c1 = arith.constant 1 : index
    %c0_4 = arith.constant 0 : index
    %c0_5 = arith.constant 0 : index
    %40 = vector.load %arg5[%c0_3, %c1, %c0_4, %c0_5] : memref<1x3x2x128xbf16, #tpu.memory_space<vmem>>, vector<1x1x2x128xbf16>
    %41 = vector.shape_cast %40 : vector<1x1x2x128xbf16> to vector<2x128xbf16>
    %42 = arith.extf %41 : vector<2x128xbf16> to vector<2x128xf32>
    %c0_6 = arith.constant 0 : index
    %c2 = arith.constant 2 : index
    %c0_7 = arith.constant 0 : index
    %c0_8 = arith.constant 0 : index
    %43 = vector.load %arg5[%c0_6, %c2, %c0_7, %c0_8] : memref<1x3x2x128xbf16, #tpu.memory_space<vmem>>, vector<1x1x2x128xbf16>
    %44 = vector.shape_cast %43 : vector<1x1x2x128xbf16> to vector<2x128xbf16>
    %45 = arith.extf %44 : vector<2x128xbf16> to vector<2x128xf32>
    %46 = vector.broadcast %3 : f32 to vector<2x128xf32>
    %47 = arith.mulf %46, %39 : vector<2x128xf32>
    %48 = vector.broadcast %6 : f32 to vector<2x128xf32>
    %49 = arith.mulf %48, %42 : vector<2x128xf32>
    %50 = arith.addf %47, %49 : vector<2x128xf32>
    %51 = vector.broadcast %9 : f32 to vector<2x128xf32>
    %52 = arith.mulf %51, %45 : vector<2x128xf32>
    %53 = arith.addf %50, %52 : vector<2x128xf32>
    %54 = vector.broadcast %12 : f32 to vector<2x128xf32>
    %55 = arith.addf %53, %54 : vector<2x128xf32>
    %56 = vector.broadcast %15 : f32 to vector<2x128xf32>
    %57 = arith.mulf %56, %39 : vector<2x128xf32>
    %58 = vector.broadcast %18 : f32 to vector<2x128xf32>
    %59 = arith.mulf %58, %42 : vector<2x128xf32>
    %60 = arith.addf %57, %59 : vector<2x128xf32>
    %61 = vector.broadcast %21 : f32 to vector<2x128xf32>
    %62 = arith.mulf %61, %45 : vector<2x128xf32>
    %63 = arith.addf %60, %62 : vector<2x128xf32>
    %64 = vector.broadcast %24 : f32 to vector<2x128xf32>
    %65 = arith.addf %63, %64 : vector<2x128xf32>
    %66 = vector.broadcast %27 : f32 to vector<2x128xf32>
    %67 = arith.mulf %66, %39 : vector<2x128xf32>
    %68 = vector.broadcast %30 : f32 to vector<2x128xf32>
    %69 = arith.mulf %68, %42 : vector<2x128xf32>
    %70 = arith.addf %67, %69 : vector<2x128xf32>
    %71 = vector.broadcast %33 : f32 to vector<2x128xf32>
    %72 = arith.mulf %71, %45 : vector<2x128xf32>
    %73 = arith.addf %70, %72 : vector<2x128xf32>
    %74 = vector.broadcast %36 : f32 to vector<2x128xf32>
    %75 = arith.addf %73, %74 : vector<2x128xf32>
    %c0_9 = arith.constant 0 : index
    %c0_10 = arith.constant 0 : index
    %c0_11 = arith.constant 0 : index
    %c0_12 = arith.constant 0 : index
    %76 = vector.load %arg7[%c0_9, %c0_10, %c0_11, %c0_12] : memref<1x3x2x128xbf16, #tpu.memory_space<vmem>>, vector<1x1x2x128xbf16>
    %77 = vector.shape_cast %76 : vector<1x1x2x128xbf16> to vector<2x128xbf16>
    %78 = arith.extf %77 : vector<2x128xbf16> to vector<2x128xf32>
    %79 = arith.subf %78, %55 : vector<2x128xf32>
    %c0_13 = arith.constant 0 : index
    %c1_14 = arith.constant 1 : index
    %c0_15 = arith.constant 0 : index
    %c0_16 = arith.constant 0 : index
    %80 = vector.load %arg7[%c0_13, %c1_14, %c0_15, %c0_16] : memref<1x3x2x128xbf16, #tpu.memory_space<vmem>>, vector<1x1x2x128xbf16>
    %81 = vector.shape_cast %80 : vector<1x1x2x128xbf16> to vector<2x128xbf16>
    %82 = arith.extf %81 : vector<2x128xbf16> to vector<2x128xf32>
    %83 = arith.subf %82, %65 : vector<2x128xf32>
    %c0_17 = arith.constant 0 : index
    %c2_18 = arith.constant 2 : index
    %c0_19 = arith.constant 0 : index
    %c0_20 = arith.constant 0 : index
    %84 = vector.load %arg7[%c0_17, %c2_18, %c0_19, %c0_20] : memref<1x3x2x128xbf16, #tpu.memory_space<vmem>>, vector<1x1x2x128xbf16>
    %85 = vector.shape_cast %84 : vector<1x1x2x128xbf16> to vector<2x128xbf16>
    %86 = arith.extf %85 : vector<2x128xbf16> to vector<2x128xf32>
    %87 = arith.subf %86, %75 : vector<2x128xf32>
    %88 = arith.mulf %79, %79 : vector<2x128xf32>
    %89 = arith.mulf %83, %83 : vector<2x128xf32>
    %90 = arith.addf %88, %89 : vector<2x128xf32>
    %91 = arith.mulf %87, %87 : vector<2x128xf32>
    %92 = arith.addf %90, %91 : vector<2x128xf32>
    %93 = math.sqrt %92 : vector<2x128xf32>
    %c0_21 = arith.constant 0 : index
    %c0_22 = arith.constant 0 : index
    %c0_23 = arith.constant 0 : index
    %94 = vector.load %arg9[%c0_21, %c0_22, %c0_23] : memref<1x2x128xbf16, #tpu.memory_space<vmem>>, vector<1x2x128xbf16>
    %95 = vector.shape_cast %94 : vector<1x2x128xbf16> to vector<2x128xbf16>
    %96 = arith.extf %95 : vector<2x128xbf16> to vector<2x128xf32>
    %97 = arith.mulf %93, %96 : vector<2x128xf32>
    %98 = vector.shape_cast %97 : vector<2x128xf32> to vector<1x2x128xf32>
    %cst = arith.constant dense<0.000000e+00> : vector<1xf32>
    %99 = vector.multi_reduction <add>, %98, %cst [1, 2] : vector<1x2x128xf32> to vector<1xf32>
    %100 = vector.shape_cast %99 : vector<1xf32> to vector<1x1x1xf32>
    %101 = vector.extract %100[0, 0, 0] : f32 from vector<1x1x1xf32>
    %c0_24 = arith.constant 0 : index
    %c0_25 = arith.constant 0 : index
    %c0_26 = arith.constant 0 : index
    %c0_27 = arith.constant 0 : index
    %102 = vector.load %arg6[%c0_24, %c0_25, %c0_26, %c0_27] : memref<1x3x2x128xbf16, #tpu.memory_space<vmem>>, vector<1x1x2x128xbf16>
    %103 = vector.shape_cast %102 : vector<1x1x2x128xbf16> to vector<2x128xbf16>
    %104 = arith.extf %103 : vector<2x128xbf16> to vector<2x128xf32>
    %c0_28 = arith.constant 0 : index
    %c1_29 = arith.constant 1 : index
    %c0_30 = arith.constant 0 : index
    %c0_31 = arith.constant 0 : index
    %105 = vector.load %arg6[%c0_28, %c1_29, %c0_30, %c0_31] : memref<1x3x2x128xbf16, #tpu.memory_space<vmem>>, vector<1x1x2x128xbf16>
    %106 = vector.shape_cast %105 : vector<1x1x2x128xbf16> to vector<2x128xbf16>
    %107 = arith.extf %106 : vector<2x128xbf16> to vector<2x128xf32>
    %c0_32 = arith.constant 0 : index
    %c2_33 = arith.constant 2 : index
    %c0_34 = arith.constant 0 : index
    %c0_35 = arith.constant 0 : index
    %108 = vector.load %arg6[%c0_32, %c2_33, %c0_34, %c0_35] : memref<1x3x2x128xbf16, #tpu.memory_space<vmem>>, vector<1x1x2x128xbf16>
    %109 = vector.shape_cast %108 : vector<1x1x2x128xbf16> to vector<2x128xbf16>
    %110 = arith.extf %109 : vector<2x128xbf16> to vector<2x128xf32>
    %111 = vector.broadcast %3 : f32 to vector<2x128xf32>
    %112 = arith.mulf %111, %104 : vector<2x128xf32>
    %113 = vector.broadcast %6 : f32 to vector<2x128xf32>
    %114 = arith.mulf %113, %107 : vector<2x128xf32>
    %115 = arith.addf %112, %114 : vector<2x128xf32>
    %116 = vector.broadcast %9 : f32 to vector<2x128xf32>
    %117 = arith.mulf %116, %110 : vector<2x128xf32>
    %118 = arith.addf %115, %117 : vector<2x128xf32>
    %119 = vector.broadcast %12 : f32 to vector<2x128xf32>
    %120 = arith.addf %118, %119 : vector<2x128xf32>
    %121 = vector.broadcast %15 : f32 to vector<2x128xf32>
    %122 = arith.mulf %121, %104 : vector<2x128xf32>
    %123 = vector.broadcast %18 : f32 to vector<2x128xf32>
    %124 = arith.mulf %123, %107 : vector<2x128xf32>
    %125 = arith.addf %122, %124 : vector<2x128xf32>
    %126 = vector.broadcast %21 : f32 to vector<2x128xf32>
    %127 = arith.mulf %126, %110 : vector<2x128xf32>
    %128 = arith.addf %125, %127 : vector<2x128xf32>
    %129 = vector.broadcast %24 : f32 to vector<2x128xf32>
    %130 = arith.addf %128, %129 : vector<2x128xf32>
    %131 = vector.broadcast %27 : f32 to vector<2x128xf32>
    %132 = arith.mulf %131, %104 : vector<2x128xf32>
    %133 = vector.broadcast %30 : f32 to vector<2x128xf32>
    %134 = arith.mulf %133, %107 : vector<2x128xf32>
    %135 = arith.addf %132, %134 : vector<2x128xf32>
    %136 = vector.broadcast %33 : f32 to vector<2x128xf32>
    %137 = arith.mulf %136, %110 : vector<2x128xf32>
    %138 = arith.addf %135, %137 : vector<2x128xf32>
    %139 = vector.broadcast %36 : f32 to vector<2x128xf32>
    %140 = arith.addf %138, %139 : vector<2x128xf32>
    %c0_36 = arith.constant 0 : index
    %c0_37 = arith.constant 0 : index
    %c0_38 = arith.constant 0 : index
    %c0_39 = arith.constant 0 : index
    %141 = vector.load %arg8[%c0_36, %c0_37, %c0_38, %c0_39] : memref<1x3x2x128xbf16, #tpu.memory_space<vmem>>, vector<1x1x2x128xbf16>
    %142 = vector.shape_cast %141 : vector<1x1x2x128xbf16> to vector<2x128xbf16>
    %143 = arith.extf %142 : vector<2x128xbf16> to vector<2x128xf32>
    %144 = arith.subf %143, %120 : vector<2x128xf32>
    %c0_40 = arith.constant 0 : index
    %c1_41 = arith.constant 1 : index
    %c0_42 = arith.constant 0 : index
    %c0_43 = arith.constant 0 : index
    %145 = vector.load %arg8[%c0_40, %c1_41, %c0_42, %c0_43] : memref<1x3x2x128xbf16, #tpu.memory_space<vmem>>, vector<1x1x2x128xbf16>
    %146 = vector.shape_cast %145 : vector<1x1x2x128xbf16> to vector<2x128xbf16>
    %147 = arith.extf %146 : vector<2x128xbf16> to vector<2x128xf32>
    %148 = arith.subf %147, %130 : vector<2x128xf32>
    %c0_44 = arith.constant 0 : index
    %c2_45 = arith.constant 2 : index
    %c0_46 = arith.constant 0 : index
    %c0_47 = arith.constant 0 : index
    %149 = vector.load %arg8[%c0_44, %c2_45, %c0_46, %c0_47] : memref<1x3x2x128xbf16, #tpu.memory_space<vmem>>, vector<1x1x2x128xbf16>
    %150 = vector.shape_cast %149 : vector<1x1x2x128xbf16> to vector<2x128xbf16>
    %151 = arith.extf %150 : vector<2x128xbf16> to vector<2x128xf32>
    %152 = arith.subf %151, %140 : vector<2x128xf32>
    %153 = arith.mulf %144, %144 : vector<2x128xf32>
    %154 = arith.mulf %148, %148 : vector<2x128xf32>
    %155 = arith.addf %153, %154 : vector<2x128xf32>
    %156 = arith.mulf %152, %152 : vector<2x128xf32>
    %157 = arith.addf %155, %156 : vector<2x128xf32>
    %158 = math.sqrt %157 : vector<2x128xf32>
    %c0_48 = arith.constant 0 : index
    %c0_49 = arith.constant 0 : index
    %c0_50 = arith.constant 0 : index
    %159 = vector.load %arg10[%c0_48, %c0_49, %c0_50] : memref<1x2x128xbf16, #tpu.memory_space<vmem>>, vector<1x2x128xbf16>
    %160 = vector.shape_cast %159 : vector<1x2x128xbf16> to vector<2x128xbf16>
    %161 = arith.extf %160 : vector<2x128xbf16> to vector<2x128xf32>
    %162 = arith.mulf %158, %161 : vector<2x128xf32>
    %163 = vector.shape_cast %162 : vector<2x128xf32> to vector<1x2x128xf32>
    %cst_51 = arith.constant dense<0.000000e+00> : vector<1xf32>
    %164 = vector.multi_reduction <add>, %163, %cst_51 [1, 2] : vector<1x2x128xf32> to vector<1xf32>
    %165 = vector.shape_cast %164 : vector<1xf32> to vector<1x1x1xf32>
    %166 = vector.extract %165[0, 0, 0] : f32 from vector<1x1x1xf32>
    %167 = arith.addf %101, %166 : f32
    %c0_i32_52 = arith.constant 0 : i32
    %168 = arith.cmpi eq, %arg1, %c0_i32_52 : i32
    %169 = arith.extui %168 : i1 to i32
    %c0_i32_53 = arith.constant 0 : i32
    %170 = arith.cmpi ne, %169, %c0_i32_53 : i32
    scf.if %170 {
      %cst_60 = arith.constant 0.000000e+00 : f32
      %175 = vector.broadcast %cst_60 : f32 to vector<1x1x1xf32>
      %c0_61 = arith.constant 0 : index
      %c0_62 = arith.constant 0 : index
      %c0_63 = arith.constant 0 : index
      %176 = vector.load %arg11[%c0_61, %c0_62, %c0_63] : memref<1x1x1xf32, #tpu.memory_space<vmem>>, vector<1x1x1xf32>
      tpu.vector_store %arg11[%c0_61, %c0_62, %c0_63], %175 {strides = array<i32>} : memref<1x1x1xf32, #tpu.memory_space<vmem>>, vector<1x1x1xf32>,
    } else {
    }
    %c0_54 = arith.constant 0 : index
    %c0_55 = arith.constant 0 : index
    %c0_56 = arith.constant 0 : index
    %171 = vector.load %arg11[%c0_54, %c0_55, %c0_56] : memref<1x1x1xf32, #tpu.memory_space<vmem>>, vector<1x1x1xf32>
    %172 = vector.broadcast %167 : f32 to vector<1x1x1xf32>
    %173 = arith.addf %171, %172 : vector<1x1x1xf32>
    %c0_57 = arith.constant 0 : index
    %c0_58 = arith.constant 0 : index
    %c0_59 = arith.constant 0 : index
    %174 = vector.load %arg11[%c0_57, %c0_58, %c0_59] : memref<1x1x1xf32, #tpu.memory_space<vmem>>, vector<1x1x1xf32>
    tpu.vector_store %arg11[%c0_57, %c0_58, %c0_59], %173 {strides = array<i32>} : memref<1x1x1xf32, #tpu.memory_space<vmem>>, vector<1x1x1xf32>,
    return
  }
  func.func @transform_0(%arg0: i32, %arg1: i32, %arg2: memref<6xi32, #tpu.memory_space<smem>>, %arg3: memref<6xi32, #tpu.memory_space<smem>>) -> i32 {
    %c0_i32 = arith.constant 0 : i32
    %c0_i32_0 = arith.constant 0 : i32
    return %c0_i32 : i32
  }
  func.func @transform_1(%arg0: i32, %arg1: i32, %arg2: memref<6xi32, #tpu.memory_space<smem>>, %arg3: memref<6xi32, #tpu.memory_space<smem>>) -> (i32, i32, i32, i32) {
    %c0_i32 = arith.constant 0 : i32
    %c0_i32_0 = arith.constant 0 : i32
    %c0_i32_1 = arith.constant 0 : i32
    return %arg0, %c0_i32, %arg1, %c0_i32_0 : i32, i32, i32, i32
  }
  func.func @transform_2(%arg0: i32, %arg1: i32, %arg2: memref<6xi32, #tpu.memory_space<smem>>, %arg3: memref<6xi32, #tpu.memory_space<smem>>) -> (i32, i32, i32, i32) {
    %c0_i32 = arith.constant 0 : i32
    %c0_i32_0 = arith.constant 0 : i32
    %c0_i32_1 = arith.constant 0 : i32
    return %arg0, %c0_i32, %arg1, %c0_i32_0 : i32, i32, i32, i32
  }
  func.func @transform_3(%arg0: i32, %arg1: i32, %arg2: memref<6xi32, #tpu.memory_space<smem>>, %arg3: memref<6xi32, #tpu.memory_space<smem>>) -> (i32, i32, i32, i32) {
    %0 = arith.index_cast %arg0 : i32 to index
    %1 = memref.load %arg2[%0] : memref<6xi32, #tpu.memory_space<smem>>
    %c0_i32 = arith.constant 0 : i32
    %c0_i32_0 = arith.constant 0 : i32
    %c0_i32_1 = arith.constant 0 : i32
    return %1, %c0_i32, %arg1, %c0_i32_0 : i32, i32, i32, i32
  }
  func.func @transform_4(%arg0: i32, %arg1: i32, %arg2: memref<6xi32, #tpu.memory_space<smem>>, %arg3: memref<6xi32, #tpu.memory_space<smem>>) -> (i32, i32, i32, i32) {
    %0 = arith.index_cast %arg0 : i32 to index
    %1 = memref.load %arg3[%0] : memref<6xi32, #tpu.memory_space<smem>>
    %c0_i32 = arith.constant 0 : i32
    %c0_i32_0 = arith.constant 0 : i32
    %c0_i32_1 = arith.constant 0 : i32
    return %1, %c0_i32, %arg1, %c0_i32_0 : i32, i32, i32, i32
  }
  func.func @transform_5(%arg0: i32, %arg1: i32, %arg2: memref<6xi32, #tpu.memory_space<smem>>, %arg3: memref<6xi32, #tpu.memory_space<smem>>) -> (i32, i32, i32) {
    %c0_i32 = arith.constant 0 : i32
    %c0_i32_0 = arith.constant 0 : i32
    return %arg0, %arg1, %c0_i32 : i32, i32, i32
  }
  func.func @transform_6(%arg0: i32, %arg1: i32, %arg2: memref<6xi32, #tpu.memory_space<smem>>, %arg3: memref<6xi32, #tpu.memory_space<smem>>) -> (i32, i32, i32) {
    %c0_i32 = arith.constant 0 : i32
    %c0_i32_0 = arith.constant 0 : i32
    return %arg0, %arg1, %c0_i32 : i32, i32, i32
  }
  func.func @transform_7(%arg0: i32, %arg1: i32, %arg2: memref<6xi32, #tpu.memory_space<smem>>, %arg3: memref<6xi32, #tpu.memory_space<smem>>) -> (i32, i32, i32) {
    %c0_i32 = arith.constant 0 : i32
    %c0_i32_0 = arith.constant 0 : i32
    %c0_i32_1 = arith.constant 0 : i32
    return %arg0, %c0_i32, %c0_i32_0 : i32, i32, i32
  }
}

</mosaic_0001>

<llo_original>
// kernel: tpu_custom_call.1
$region0: #{tpu_custom_call.1}
  #allocation0 [shape = 'u32[]', space=smem, size = 0x4, offset = 0x4, fixed_abs, tag = 'smem constant byte address 0x4 - core index']
  #allocation1 [shape = 'u32[72,128]{1,0:T(1,128)}', space=vmem, size = 0x9000, scoped, tag = 'internal scratch']
  #allocation2 [shape = 's32[1]{0}', space=sflag, size = 0x4, scoped, tag = 'scoped memory for tpu_custom_call.1']
  #allocation3 [shape = 'u8[512]{0}', space=smem, size = 0x200, scoped, tag = 'prefetched SMEM operand 0']
  #allocation4 [shape = 'u8[512]{0}', space=smem, size = 0x200, scoped, tag = 'prefetched SMEM operand 1']
  %s0 = inlined_call_operand.hbm [shape: s32[6], index: 0, kind: input, shape index: {}]
  %s1 = inlined_call_operand.hbm [shape: s32[6], index: 1, kind: input, shape index: {}]
  %s2 = inlined_call_operand.hbm [shape: f32[72], index: 2, kind: input, shape index: {}]
  %s3 = inlined_call_operand.hbm [shape: bf16[6,3,2,128], index: 3, kind: input, shape index: {}]
  %s4 = inlined_call_operand.hbm [shape: bf16[6,3,2,128], index: 4, kind: input, shape index: {}]
  %s5 = inlined_call_operand.hbm [shape: bf16[3,3,2,128], index: 5, kind: input, shape index: {}]
  %s6 = inlined_call_operand.hbm [shape: bf16[3,3,2,128], index: 6, kind: input, shape index: {}]
  %s7 = inlined_call_operand.vmem [shape: bf16[6,2,128], index: 7, kind: input, shape index: {}]
  %s8 = inlined_call_operand.hbm [shape: bf16[6,2,128], index: 8, kind: input, shape index: {}]
  %s9 = inlined_call_operand.vmem [shape: f32[6,1,1], index: 9, kind: output, shape index: {}]
  %s10 = sld [smem:[#allocation0]]
  $region89: #{tpu_custom_call.1} parent=0
    _
  %s12 = ssub.s32 1, %s10
  %s13 = scalar_select 0, %s12, %s10
  %s15 = sshll.u32 %s0, 4
  %s16 = int_to_ptr.hbm [resolvable:$true] %s15
  %18 = dma.hbm_to_smem %s16, 16, [#allocation3], [#allocation2]
  %s20 = sshll.u32 %s1, 4
  %s21 = int_to_ptr.hbm [resolvable:$true] %s20
  %23 = dma.hbm_to_smem %s21, 16, [#allocation4], [#allocation2]
  %25 = dma.done [#allocation2], 32
  %26 = sfence
  $region1: #{tpu_custom_call.1} parent=0
    #allocation5 [shape = 'u8[512]{0}', space=smem, size = 0x200, scoped, tag = 'input window, operand 2, single buffered']
    #allocation6 [shape = 's32[2]{0}', space=sflag, size = 0x8, scoped, tag = 'scoped memory for tpu_custom_call.1']
    #allocation7 [shape = 's32[2]{0}', space=sflag, size = 0x8, scoped, tag = 'scoped memory for tpu_custom_call.1']
    #allocation8 [shape = 'u8[3072]{0}', space=vmem, size = 0xc00, scoped, tag = 'input window, operand 3']
    #allocation9 [shape = 'u8[3072]{0}', space=vmem, size = 0xc00, scoped, tag = 'input window, operand 4']
    #allocation10 [shape = 's32[2]{0}', space=sflag, size = 0x8, scoped, tag = 'scoped memory for tpu_custom_call.1']
    #allocation11 [shape = 'u8[3072]{0}', space=vmem, size = 0xc00, scoped, tag = 'input window, operand 5']
    #allocation12 [shape = 'u8[3072]{0}', space=vmem, size = 0xc00, scoped, tag = 'input window, operand 6']
    #allocation13 [shape = 's32[2]{0}', space=sflag, size = 0x8, scoped, tag = 'scoped memory for tpu_custom_call.1']
    #allocation14 [shape = 'u8[1024]{0}', space=vmem, size = 0x400, scoped, tag = 'input window, operand 8']
    %27 = vsyncpa [#allocation7], 0
    %28 = vsyncpa [#allocation6], 0
    %s29 = scalar_lea.sflag [#allocation6], 1
    %30 = vsyncpa %s29, 0
    %31 = vsyncpa [#allocation10], 0
    %s32 = scalar_lea.sflag [#allocation10], 1
    %33 = vsyncpa %s32, 0
    %34 = vsyncpa [#allocation13], 0
    %s35 = scalar_lea.sflag [#allocation13], 1
    %36 = vsyncpa %s35, 0
    loop: start=0, step=1, limit=8
    $region2: #{tpu_custom_call.1} parent=1 // loop_pre_header
      _
    $region3: #{tpu_custom_call.1} parent=1 // loop_header
      %s38 = sphi 0, %s42
      %p39 = scmp.ge.s32.totalorder %s38, 8
      %s45 = sphi 0, %s57
      %s46 = sphi 0, %s53
      %s47 = sphi 0, %s45
      %s48 = sphi 0, %s46
      %s49 = sphi 0, %s47
      %s50 = sphi 0, %s48
      %s58 = sphi 0, %s58
      %s60 = sphi 0, %s58
      %s61 = sphi 0, %s60
      %s75 = sphi 0, %s61
      %s83 = sphi 0, %s85
      %s86 = sphi 0, %s83
      %s87 = sphi 0, %s86
      %s103 = sphi 0, %s87
      %s111 = sphi 0, %s113
      %s114 = sphi 0, %s111
      %s115 = sphi 0, %s114
      %s131 = sphi 0, %s115
      %s141 = sphi 0, %s143
      %s144 = sphi 0, %s141
      %s145 = sphi 0, %s144
      %s161 = sphi 0, %s145
      %s171 = sphi 0, %s173
      %s174 = sphi 0, %s171
      %s175 = sphi 0, %s174
      %s191 = sphi 0, %s175
      %s199 = sphi 0, %s201
      %s202 = sphi 0, %s199
      %s203 = sphi 0, %s202
      %s219 = sphi 0, %s203
      %s227 = sphi 0, %s229
      %s230 = sphi 0, %s227
      %s231 = sphi 0, %s230
      %s247 = sphi 0, %s231
      %s253 = sphi 0, %s255
      %s256 = sphi 0, %s253
      %s257 = sphi 0, %s256
      %s273 = sphi 0, %s257
    $region4: #{tpu_custom_call.1} parent=1 // loop_header_branch
      %41 = sbr.rel (%p39) target = $region8
    $region5: #{tpu_custom_call.1} parent=1 // loop_body
      %s43 = ssub.s32 %s38, 1
      %s44 = ssub.s32 %s38, 2
      %s51 = sadd.s32 1, %s46
      %p52 = scmp.ge.s32.totalorder %s51, 1
      %s53 = scalar_select %p52, 0, %s51
      %s54 = sadd.s32 1, %s45
      %s55 = scalar_select %p52, %s54, %s45
      %p56 = scmp.ge.s32.totalorder %s55, 6
      %s57 = scalar_select %p56, 0, %s55
      %s59 = sadd.s32 %s58, 1
      %p62 = scmp.eq.s32.totalorder %s38, 5
      %p63 = scmp.ne.s32.totalorder %s58, %s60
      %p64 = scmp.eq.s32.totalorder %s38, 0
      %p65 = por %p63, %p64
      %p66 = scmp.ne.s32.totalorder %s58, %s60
      %p67 = scmp.eq.s32.totalorder %s43, 5
      %p68 = por %p66, %p67
      %p69 = scmp.ne.s32.totalorder %s60, %s61
      %p70 = scmp.eq.s32.totalorder %s43, 0
      %p71 = por %p69, %p70
      %p72 = scmp.ne.s32.totalorder %s60, %s61
      %p73 = scmp.eq.s32.totalorder %s44, 5
      %p74 = por %p72, %p73
      %p76 = scmp.ne.s32.totalorder %s61, %s75
      %p77 = scmp.eq.s32.totalorder %s44, 0
      %p78 = por %p76, %p77
      %s79 = ssub.s32 %s45, %s57
      %s80 = ssub.s32 %s46, %s53
      %s81 = sor.u32 %s79, %s80
      %p82 = scmp.eq.s32.totalorder %s81, 0
      %s84 = sadd.s32 %s83, 1
      %s85 = scalar_select %p82, %s83, %s84
      %p88 = pneg %p82
      %p89 = scmp.eq.s32.totalorder %s38, 5
      %p90 = por %p88, %p89
      %p91 = scmp.ne.s32.totalorder %s83, %s86
      %p92 = scmp.eq.s32.totalorder %s38, 0
      %p93 = por %p91, %p92
      %p94 = scmp.ne.s32.totalorder %s83, %s86
      %p95 = scmp.eq.s32.totalorder %s43, 5
      %p96 = por %p94, %p95
      %p97 = scmp.ne.s32.totalorder %s86, %s87
      %p98 = scmp.eq.s32.totalorder %s43, 0
      %p99 = por %p97, %p98
      %p100 = scmp.ne.s32.totalorder %s86, %s87
      %p101 = scmp.eq.s32.totalorder %s44, 5
      %p102 = por %p100, %p101
      %p104 = scmp.ne.s32.totalorder %s87, %s103
      %p105 = scmp.eq.s32.totalorder %s44, 0
      %p106 = por %p104, %p105
      %s107 = ssub.s32 %s45, %s57
      %s108 = ssub.s32 %s46, %s53
      %s109 = sor.u32 %s107, %s108
      %p110 = scmp.eq.s32.totalorder %s109, 0
      %s112 = sadd.s32 %s111, 1
      %s113 = scalar_select %p110, %s111, %s112
      %p116 = pneg %p110
      %p117 = scmp.eq.s32.totalorder %s38, 5
      %p118 = por %p116, %p117
      %p119 = scmp.ne.s32.totalorder %s111, %s114
      %p120 = scmp.eq.s32.totalorder %s38, 0
      %p121 = por %p119, %p120
      %p122 = scmp.ne.s32.totalorder %s111, %s114
      %p123 = scmp.eq.s32.totalorder %s43, 5
      %p124 = por %p122, %p123
      %p125 = scmp.ne.s32.totalorder %s114, %s115
      %p126 = scmp.eq.s32.totalorder %s43, 0
      %p127 = por %p125, %p126
      %p128 = scmp.ne.s32.totalorder %s114, %s115
      %p129 = scmp.eq.s32.totalorder %s44, 5
      %p130 = por %p128, %p129
      %p132 = scmp.ne.s32.totalorder %s115, %s131
      %p133 = scmp.eq.s32.totalorder %s44, 0
      %p134 = por %p132, %p133
      %s135 = sld [smem:[#allocation3 + %s45]]
      %s136 = sld [smem:[#allocation3 + %s57]]
      %s137 = ssub.s32 %s135, %s136
      %s138 = ssub.s32 %s46, %s53
      %s139 = sor.u32 %s137, %s138
      %p140 = scmp.eq.s32.totalorder %s139, 0
      %s142 = sadd.s32 %s141, 1
      %s143 = scalar_select %p140, %s141, %s142
      %p146 = pneg %p140
      %p147 = scmp.eq.s32.totalorder %s38, 5
      %p148 = por %p146, %p147
      %p149 = scmp.ne.s32.totalorder %s141, %s144
      %p150 = scmp.eq.s32.totalorder %s38, 0
      %p151 = por %p149, %p150
      %p152 = scmp.ne.s32.totalorder %s141, %s144
      %p153 = scmp.eq.s32.totalorder %s43, 5
      %p154 = por %p152, %p153
      %p155 = scmp.ne.s32.totalorder %s144, %s145
      %p156 = scmp.eq.s32.totalorder %s43, 0
      %p157 = por %p155, %p156
      %p158 = scmp.ne.s32.totalorder %s144, %s145
      %p159 = scmp.eq.s32.totalorder %s44, 5
      %p160 = por %p158, %p159
      %p162 = scmp.ne.s32.totalorder %s145, %s161
      %p163 = scmp.eq.s32.totalorder %s44, 0
      %p164 = por %p162, %p163
      %s165 = sld [smem:[#allocation4 + %s45]]
      %s166 = sld [smem:[#allocation4 + %s57]]
      %s167 = ssub.s32 %s165, %s166
      %s168 = ssub.s32 %s46, %s53
      %s169 = sor.u32 %s167, %s168
      %p170 = scmp.eq.s32.totalorder %s169, 0
      %s172 = sadd.s32 %s171, 1
      %s173 = scalar_select %p170, %s171, %s172
      %p176 = pneg %p170
      %p177 = scmp.eq.s32.totalorder %s38, 5
      %p178 = por %p176, %p177
      %p179 = scmp.ne.s32.totalorder %s171, %s174
      %p180 = scmp.eq.s32.totalorder %s38, 0
      %p181 = por %p179, %p180
      %p182 = scmp.ne.s32.totalorder %s171, %s174
      %p183 = scmp.eq.s32.totalorder %s43, 5
      %p184 = por %p182, %p183
      %p185 = scmp.ne.s32.totalorder %s174, %s175
      %p186 = scmp.eq.s32.totalorder %s43, 0
      %p187 = por %p185, %p186
      %p188 = scmp.ne.s32.totalorder %s174, %s175
      %p189 = scmp.eq.s32.totalorder %s44, 5
      %p190 = por %p188, %p189
      %p192 = scmp.ne.s32.totalorder %s175, %s191
      %p193 = scmp.eq.s32.totalorder %s44, 0
      %p194 = por %p192, %p193
      %s195 = ssub.s32 %s45, %s57
      %s196 = ssub.s32 %s46, %s53
      %s197 = sor.u32 %s195, %s196
      %p198 = scmp.eq.s32.totalorder %s197, 0
      %s200 = sadd.s32 %s199, 1
      %s201 = scalar_select %p198, %s199, %s200
      %p204 = pneg %p198
      %p205 = scmp.eq.s32.totalorder %s38, 5
      %p206 = por %p204, %p205
      %p207 = scmp.ne.s32.totalorder %s199, %s202
      %p208 = scmp.eq.s32.totalorder %s38, 0
      %p209 = por %p207, %p208
      %p210 = scmp.ne.s32.totalorder %s199, %s202
      %p211 = scmp.eq.s32.totalorder %s43, 5
      %p212 = por %p210, %p211
      %p213 = scmp.ne.s32.totalorder %s202, %s203
      %p214 = scmp.eq.s32.totalorder %s43, 0
      %p215 = por %p213, %p214
      %p216 = scmp.ne.s32.totalorder %s202, %s203
      %p217 = scmp.eq.s32.totalorder %s44, 5
      %p218 = por %p216, %p217
      %p220 = scmp.ne.s32.totalorder %s203, %s219
      %p221 = scmp.eq.s32.totalorder %s44, 0
      %p222 = por %p220, %p221
      %s223 = ssub.s32 %s45, %s57
      %s224 = ssub.s32 %s46, %s53
      %s225 = sor.u32 %s223, %s224
      %p226 = scmp.eq.s32.totalorder %s225, 0
      %s228 = sadd.s32 %s227, 1
      %s229 = scalar_select %p226, %s227, %s228
      %p232 = pneg %p226
      %p233 = scmp.eq.s32.totalorder %s38, 5
      %p234 = por %p232, %p233
      %p235 = scmp.ne.s32.totalorder %s227, %s230
      %p236 = scmp.eq.s32.totalorder %s38, 0
      %p237 = por %p235, %p236
      %p238 = scmp.ne.s32.totalorder %s227, %s230
      %p239 = scmp.eq.s32.totalorder %s43, 5
      %p240 = por %p238, %p239
      %p241 = scmp.ne.s32.totalorder %s230, %s231
      %p242 = scmp.eq.s32.totalorder %s43, 0
      %p243 = por %p241, %p242
      %p244 = scmp.ne.s32.totalorder %s230, %s231
      %p245 = scmp.eq.s32.totalorder %s44, 5
      %p246 = por %p244, %p245
      %p248 = scmp.ne.s32.totalorder %s231, %s247
      %p249 = scmp.eq.s32.totalorder %s44, 0
      %p250 = por %p248, %p249
      %s251 = ssub.s32 %s45, %s57
      %p252 = scmp.eq.s32.totalorder %s251, 0
      %s254 = sadd.s32 %s253, 1
      %s255 = scalar_select %p252, %s253, %s254
      %p258 = pneg %p252
      %p259 = scmp.eq.s32.totalorder %s38, 5
      %p260 = por %p258, %p259
      %p261 = scmp.ne.s32.totalorder %s253, %s256
      %p262 = scmp.eq.s32.totalorder %s38, 0
      %p263 = por %p261, %p262
      %p264 = scmp.ne.s32.totalorder %s253, %s256
      %p265 = scmp.eq.s32.totalorder %s43, 5
      %p266 = por %p264, %p265
      %p267 = scmp.ne.s32.totalorder %s256, %s257
      %p268 = scmp.eq.s32.totalorder %s43, 0
      %p269 = por %p267, %p268
      %p270 = scmp.ne.s32.totalorder %s256, %s257
      %p271 = scmp.eq.s32.totalorder %s44, 5
      %p272 = por %p270, %p271
      %p274 = scmp.ne.s32.totalorder %s257, %s273
      %p275 = scmp.eq.s32.totalorder %s44, 0
      %p276 = por %p274, %p275
      %p277 = scmp.le.s32.totalorder 1, %s38
      %p278 = scmp.lt.s32.totalorder %s38, 7
      %p279 = pnand %p277, %p278
      %p280 = pneg %p279
      // Predicated region
      $region9: #{tpu_custom_call.1} parent=5 // pred_check
        _
      $region10: #{tpu_custom_call.1} parent=5 // pred_check_branch
        %282 = sbr.rel (%p279) target = $region12
      $region11: #{tpu_custom_call.1} parent=5 // pred_region
        %s283 = ssub.s32 %s38, 1
        // Predicated region
        $region13: #{tpu_custom_call.1} parent=11 // pred_check
          %p284 = pneg %p71
        $region14: #{tpu_custom_call.1} parent=11 // pred_check_branch
          %286 = sbr.rel (%p284) target = $region16
        $region15: #{tpu_custom_call.1} parent=11 // pred_region
          %288 = vsyncadd [#allocation7], 0
          %s290 = sshll.u32 %s2, 4
          %s291 = int_to_ptr.hbm [resolvable:$true] %s290
          %293 = dma.hbm_to_smem %s291, 16, [#allocation5], [#allocation7]
        $region16: #{tpu_custom_call.1} parent=11 // pred_fallthru
          _
      $region12: #{tpu_custom_call.1} parent=5 // pred_fallthru
        _
      %p294 = scmp.lt.s32.totalorder %s38, 6
      // Predicated region
      $region17: #{tpu_custom_call.1} parent=5 // pred_check
        %p295 = pneg %p294
      $region18: #{tpu_custom_call.1} parent=5 // pred_check_branch
        %297 = sbr.rel (%p295) target = $region20
      $region19: #{tpu_custom_call.1} parent=5 // pred_region
        // Predicated region
        $region21: #{tpu_custom_call.1} parent=19 // pred_check
          %p298 = pneg %p93
        $region22: #{tpu_custom_call.1} parent=19 // pred_check_branch
          %300 = sbr.rel (%p298) target = $region24
        $region23: #{tpu_custom_call.1} parent=19 // pred_region
          %s301 = sand.u32 %s83, 1
          %s302 = scalar_lea.sflag [#allocation6], %s301
          %s303 = sand.u32 %s83, 1
          %s304 = smul.addr %s303, 3
          %s305 = scalar_lea.vmem [#allocation8], %s304
          %307 = vsyncadd %s302, 0
          %s308 = smul.addr %s45, 3
          %s309 = sadd.s32 %s46, %s308
          %s310 = scalar_lea.hbm %s3, %s309
          %s311 = sshll.u32 %s310, 4
          %s312 = int_to_ptr.hbm [resolvable:$true] %s311
          %s313 = sshll.u32 %s305, 4
          %s314 = int_to_ptr.vmem [resolvable:$true] %s313
          %319 = dma.hbm_to_vmem [thread:$0]  %s312, 48, %s314, %s302, 16, 16, 1
        $region24: #{tpu_custom_call.1} parent=19 // pred_fallthru
          _
        // Predicated region
        $region25: #{tpu_custom_call.1} parent=19 // pred_check
          %p320 = pneg %p121
        $region26: #{tpu_custom_call.1} parent=19 // pred_check_branch
          %322 = sbr.rel (%p320) target = $region28
        $region27: #{tpu_custom_call.1} parent=19 // pred_region
          %s323 = sand.u32 %s38, 1
          %s324 = scalar_lea.sflag [#allocation10], %s323
          %s325 = sand.u32 %s111, 1
          %s326 = smul.addr %s325, 3
          %s327 = scalar_lea.vmem [#allocation9], %s326
          %329 = vsyncadd %s324, 0
          %s330 = smul.addr %s45, 3
          %s331 = sadd.s32 %s46, %s330
          %s332 = scalar_lea.hbm %s4, %s331
          %s333 = sshll.u32 %s332, 4
          %s334 = int_to_ptr.hbm [resolvable:$true] %s333
          %s335 = sshll.u32 %s327, 4
          %s336 = int_to_ptr.vmem [resolvable:$true] %s335
          %341 = dma.hbm_to_vmem [thread:$0]  %s334, 48, %s336, %s324, 16, 16, 1
        $region28: #{tpu_custom_call.1} parent=19 // pred_fallthru
          _
        // Predicated region
        $region29: #{tpu_custom_call.1} parent=19 // pred_check
          %p342 = pneg %p151
        $region30: #{tpu_custom_call.1} parent=19 // pred_check_branch
          %344 = sbr.rel (%p342) target = $region32
        $region31: #{tpu_custom_call.1} parent=19 // pred_region
          %s345 = sand.u32 %s38, 1
          %s346 = scalar_lea.sflag [#allocation10], %s345
          %s347 = sand.u32 %s141, 1
          %s348 = smul.addr %s347, 3
          %s349 = scalar_lea.vmem [#allocation11], %s348
          %s350 = sld [smem:[#allocation3 + %s45]]
          %352 = vsyncadd %s346, 0
          %s353 = smul.addr %s350, 3
          %s354 = sadd.s32 %s46, %s353
          %s355 = scalar_lea.hbm %s5, %s354
          %s356 = sshll.u32 %s355, 4
          %s357 = int_to_ptr.hbm [resolvable:$true] %s356
          %s358 = sshll.u32 %s349, 4
          %s359 = int_to_ptr.vmem [resolvable:$true] %s358
          %364 = dma.hbm_to_vmem [thread:$0]  %s357, 48, %s359, %s346, 16, 16, 1
        $region32: #{tpu_custom_call.1} parent=19 // pred_fallthru
          _
        // Predicated region
        $region33: #{tpu_custom_call.1} parent=19 // pred_check
          %p365 = pneg %p181
        $region34: #{tpu_custom_call.1} parent=19 // pred_check_branch
          %367 = sbr.rel (%p365) target = $region36
        $region35: #{tpu_custom_call.1} parent=19 // pred_region
          %s368 = sand.u32 %s38, 1
          %s369 = scalar_lea.sflag [#allocation13], %s368
          %s370 = sand.u32 %s171, 1
          %s371 = smul.addr %s370, 3
          %s372 = scalar_lea.vmem [#allocation12], %s371
          %s373 = sld [smem:[#allocation4 + %s45]]
          %375 = vsyncadd %s369, 0
          %s376 = smul.addr %s373, 3
          %s377 = sadd.s32 %s46, %s376
          %s378 = scalar_lea.hbm %s6, %s377
          %s379 = sshll.u32 %s378, 4
          %s380 = int_to_ptr.hbm [resolvable:$true] %s379
          %s381 = sshll.u32 %s372, 4
          %s382 = int_to_ptr.vmem [resolvable:$true] %s381
          %387 = dma.hbm_to_vmem [thread:$0]  %s380, 48, %s382, %s369, 16, 16, 1
        $region36: #{tpu_custom_call.1} parent=19 // pred_fallthru
          _
        // Predicated region
        $region37: #{tpu_custom_call.1} parent=19 // pred_check
          %p388 = pneg %p209
        $region38: #{tpu_custom_call.1} parent=19 // pred_check_branch
          %390 = sbr.rel (%p388) target = $region40
        $region39: #{tpu_custom_call.1} parent=19 // pred_region
          %p391 = scmp.lt.s32.totalorder %s45, 5
          %s392 = scalar_select %p391, %s45, 5
          %p393 = scmp.lt.s32.totalorder %s46, 0
          %s394 = scalar_select %p393, %s46, 0
          %s395 = sadd.s32 %s394, %s392
          %s396 = scalar_lea.vmem %s7, %s395
        $region40: #{tpu_custom_call.1} parent=19 // pred_fallthru
          _
        // Predicated region
        $region41: #{tpu_custom_call.1} parent=19 // pred_check
          %p397 = pneg %p237
        $region42: #{tpu_custom_call.1} parent=19 // pred_check_branch
          %399 = sbr.rel (%p397) target = $region44
        $region43: #{tpu_custom_call.1} parent=19 // pred_region
          %s400 = sand.u32 %s38, 1
          %s401 = scalar_lea.sflag [#allocation13], %s400
          %s402 = sand.u32 %s227, 1
          %s403 = scalar_lea.vmem [#allocation14], %s402
          %405 = vsyncadd %s401, 0
          %s406 = sadd.s32 %s46, %s45
          %s407 = scalar_lea.hbm %s8, %s406
          %s409 = sshll.u32 %s407, 4
          %s410 = int_to_ptr.hbm [resolvable:$true] %s409
          %s411 = sshll.u32 %s403, 4
          %s412 = int_to_ptr.vmem [resolvable:$true] %s411
          %414 = dma.hbm_to_vmem [thread:$0]  %s410, 16, %s412, %s401
        $region44: #{tpu_custom_call.1} parent=19 // pred_fallthru
          _
      $region20: #{tpu_custom_call.1} parent=5 // pred_fallthru
        _
      %p415 = scmp.le.s32.totalorder 1, %s38
      %p416 = scmp.lt.s32.totalorder %s38, 7
      %p417 = pnand %p415, %p416
      %p418 = pneg %p417
      // Predicated region
      $region45: #{tpu_custom_call.1} parent=5 // pred_check
        _
      $region46: #{tpu_custom_call.1} parent=5 // pred_check_branch
        %420 = sbr.rel (%p417) target = $region48
      $region47: #{tpu_custom_call.1} parent=5 // pred_region
        %s421 = ssub.s32 %s38, 1
        // Predicated region
        $region49: #{tpu_custom_call.1} parent=47 // pred_check
          %p422 = pneg %p71
        $region50: #{tpu_custom_call.1} parent=47 // pred_check_branch
          %424 = sbr.rel (%p422) target = $region52
        $region51: #{tpu_custom_call.1} parent=47 // pred_region
          %426 = dma.done [#allocation7], 16
        $region52: #{tpu_custom_call.1} parent=47 // pred_fallthru
          _
        %s427 = sand.u32 %s86, 1
        %s428 = scalar_lea.sflag [#allocation6], %s427
        %s429 = sand.u32 %s86, 1
        %s430 = smul.addr %s429, 3
        %s431 = scalar_lea.vmem [#allocation8], %s430
        // Predicated region
        $region53: #{tpu_custom_call.1} parent=47 // pred_check
          %p432 = pneg %p99
        $region54: #{tpu_custom_call.1} parent=47 // pred_check_branch
          %434 = sbr.rel (%p432) target = $region56
        $region55: #{tpu_custom_call.1} parent=47 // pred_region
          %436 = dma.done %s428, 48
        $region56: #{tpu_custom_call.1} parent=47 // pred_fallthru
          _
        %s437 = sand.u32 %s43, 1
        %s438 = scalar_lea.sflag [#allocation10], %s437
        %s439 = sand.u32 %s114, 1
        %s440 = smul.addr %s439, 3
        %s441 = scalar_lea.vmem [#allocation9], %s440
        // Predicated region
        $region57: #{tpu_custom_call.1} parent=47 // pred_check
          %p442 = pneg %p127
        $region58: #{tpu_custom_call.1} parent=47 // pred_check_branch
          %444 = sbr.rel (%p442) target = $region60
        $region59: #{tpu_custom_call.1} parent=47 // pred_region
          %446 = dma.done %s438, 48
        $region60: #{tpu_custom_call.1} parent=47 // pred_fallthru
          _
        %s447 = sand.u32 %s43, 1
        %s448 = scalar_lea.sflag [#allocation10], %s447
        %s449 = sand.u32 %s144, 1
        %s450 = smul.addr %s449, 3
        %s451 = scalar_lea.vmem [#allocation11], %s450
        // Predicated region
        $region61: #{tpu_custom_call.1} parent=47 // pred_check
          %p452 = pneg %p157
        $region62: #{tpu_custom_call.1} parent=47 // pred_check_branch
          %454 = sbr.rel (%p452) target = $region64
        $region63: #{tpu_custom_call.1} parent=47 // pred_region
          %456 = dma.done %s448, 48
        $region64: #{tpu_custom_call.1} parent=47 // pred_fallthru
          _
        %s457 = sand.u32 %s43, 1
        %s458 = scalar_lea.sflag [#allocation13], %s457
        %s459 = sand.u32 %s174, 1
        %s460 = smul.addr %s459, 3
        %s461 = scalar_lea.vmem [#allocation12], %s460
        // Predicated region
        $region65: #{tpu_custom_call.1} parent=47 // pred_check
          %p462 = pneg %p187
        $region66: #{tpu_custom_call.1} parent=47 // pred_check_branch
          %464 = sbr.rel (%p462) target = $region68
        $region67: #{tpu_custom_call.1} parent=47 // pred_region
          %466 = dma.done %s458, 48
        $region68: #{tpu_custom_call.1} parent=47 // pred_fallthru
          _
        %s467 = sand.u32 %s43, 1
        %s468 = scalar_lea.sflag [#allocation13], %s467
        %s469 = sand.u32 %s230, 1
        %s470 = scalar_lea.vmem [#allocation14], %s469
        // Predicated region
        $region69: #{tpu_custom_call.1} parent=47 // pred_check
          %p471 = pneg %p243
        $region70: #{tpu_custom_call.1} parent=47 // pred_check_branch
          %473 = sbr.rel (%p471) target = $region72
        $region71: #{tpu_custom_call.1} parent=47 // pred_region
          %475 = dma.done %s468, 16
        $region72: #{tpu_custom_call.1} parent=47 // pred_fallthru
          _
        %476 = sfence
        %p477 = pneg %p71
        %p478 = pneg %p68
        %s479 = sand.u32 %s86, 1
        %s480 = scalar_lea.sflag [#allocation6], %s479
        %s481 = sand.u32 %s86, 1
        %s482 = smul.addr %s481, 3
        %s483 = scalar_lea.vmem [#allocation8], %s482
        %p484 = pneg %p99
        %p485 = pneg %p96
        %s486 = sand.u32 %s43, 1
        %s487 = scalar_lea.sflag [#allocation10], %s486
        %s488 = sand.u32 %s114, 1
        %s489 = smul.addr %s488, 3
        %s490 = scalar_lea.vmem [#allocation9], %s489
        %p491 = pneg %p127
        %p492 = pneg %p124
        %s493 = sand.u32 %s43, 1
        %s494 = scalar_lea.sflag [#allocation10], %s493
        %s495 = sand.u32 %s144, 1
        %s496 = smul.addr %s495, 3
        %s497 = scalar_lea.vmem [#allocation11], %s496
        %p498 = pneg %p157
        %p499 = pneg %p154
        %s500 = sand.u32 %s43, 1
        %s501 = scalar_lea.sflag [#allocation13], %s500
        %s502 = sand.u32 %s174, 1
        %s503 = smul.addr %s502, 3
        %s504 = scalar_lea.vmem [#allocation12], %s503
        %p505 = pneg %p187
        %p506 = pneg %p184
        %p507 = scmp.lt.s32.totalorder %s47, 5
        %s508 = scalar_select %p507, %s47, 5
        %p509 = scmp.lt.s32.totalorder %s48, 0
        %s510 = scalar_select %p509, %s48, 0
        %s511 = sadd.s32 %s510, %s508
        %s512 = scalar_lea.vmem %s7, %s511
        %p513 = pneg %p215
        %p514 = pneg %p212
        %s515 = sand.u32 %s43, 1
        %s516 = scalar_lea.sflag [#allocation13], %s515
        %s517 = sand.u32 %s230, 1
        %s518 = scalar_lea.vmem [#allocation14], %s517
        %p519 = pneg %p243
        %p520 = pneg %p240
        %p521 = pneg %p269
        %p522 = pneg %p266
        %p523 = scmp.lt.s32.totalorder %s47, 5
        %s524 = scalar_select %p523, %s47, 5
        %s525 = scalar_lea.vmem %s9, %s524
        %s526 = sld [smem:[#allocation3 + %s47]]
        %s527 = sld [smem:[#allocation4 + %s47]]
        %p528 = scmp.lt.s32.totalorder %s47, 5
        %s529 = scalar_select %p528, %s47, 5
        %p530 = scmp.lt.s32.totalorder %s48, 0
        %s531 = scalar_select %p530, %s48, 0
        %s532 = sadd.s32 %s531, %s529
        %s533 = scalar_lea.vmem %s7, %s532
        %p534 = scmp.lt.s32.totalorder %s47, 5
        %s535 = scalar_select %p534, %s47, 5
        %s536 = scalar_lea.vmem %s9, %s535
        %s537 = smul.u32 %s47, 12
        %s538 = sld [smem:[#allocation5 + %s537]]
        %s539 = sadd.s32 %s537, 1
        %s540 = sld [smem:[#allocation5 + %s539]]
        %s541 = sadd.s32 %s537, 2
        %s542 = sld [smem:[#allocation5 + %s541]]
        %s543 = sadd.s32 %s537, 3
        %s544 = sld [smem:[#allocation5 + %s543]]
        %s545 = sadd.s32 %s537, 4
        %s546 = sld [smem:[#allocation5 + %s545]]
        %s547 = sadd.s32 %s537, 5
        %s548 = sld [smem:[#allocation5 + %s547]]
        %s549 = sadd.s32 %s537, 6
        %s550 = sld [smem:[#allocation5 + %s549]]
        %s551 = sadd.s32 %s537, 7
        %s552 = sld [smem:[#allocation5 + %s551]]
        %s553 = sadd.s32 %s537, 8
        %s554 = sld [smem:[#allocation5 + %s553]]
        %s555 = sadd.s32 %s537, 9
        %s556 = sld [smem:[#allocation5 + %s555]]
        %s557 = sadd.s32 %s537, 10
        %s558 = sld [smem:[#allocation5 + %s557]]
        %s559 = sadd.s32 %s537, 11
        %s560 = sld [smem:[#allocation5 + %s559]]
        %v561 = vld [vmem:[%s431] sm:$0x1]
        %v562 = vunpack.c.l.bf16 %v561
        %s563 = scalar_lea.vmem %s431, 1 [#allocation8]
        %v564 = vld [vmem:[%s563] sm:$0x1]
        %v565 = vunpack.c.l.bf16 %v564
        %s566 = scalar_lea.vmem %s431, 2 [#allocation8]
        %v567 = vld [vmem:[%s566] sm:$0x1]
        %v568 = vunpack.c.l.bf16 %v567
        %v569 = vstv %s538
        %v570 = vmul.f32 %v569, %v562
        %v571 = vstv %s540
        %v572 = vmul.f32 %v571, %v565
        %v573 = vadd.f32 %v570, %v572
        %v574 = vstv %s542
        %v575 = vmul.f32 %v574, %v568
        %v576 = vadd.f32 %v573, %v575
        %v577 = vstv %s544
        %v578 = vadd.f32 %v576, %v577
        %v579 = vstv %s546
        %v580 = vmul.f32 %v579, %v562
        %v581 = vstv %s548
        %v582 = vmul.f32 %v581, %v565
        %v583 = vadd.f32 %v580, %v582
        %v584 = vstv %s550
        %v585 = vmul.f32 %v584, %v568
        %v586 = vadd.f32 %v583, %v585
        %v587 = vstv %s552
        %v588 = vadd.f32 %v586, %v587
        %v589 = vstv %s554
        %v590 = vmul.f32 %v589, %v562
        %v591 = vstv %s556
        %v592 = vmul.f32 %v591, %v565
        %v593 = vadd.f32 %v590, %v592
        %v594 = vstv %s558
        %v595 = vmul.f32 %v594, %v568
        %v596 = vadd.f32 %v593, %v595
        %v597 = vstv %s560
        %v598 = vadd.f32 %v596, %v597
        %v599 = vld [vmem:[%s451] sm:$0x1]
        %v600 = vunpack.c.l.bf16 %v599
        %v601 = vsub.f32 %v600, %v578
        %s602 = scalar_lea.vmem %s451, 1 [#allocation11]
        %v603 = vld [vmem:[%s602] sm:$0x1]
        %v604 = vunpack.c.l.bf16 %v603
        %v605 = vsub.f32 %v604, %v588
        %s606 = scalar_lea.vmem %s451, 2 [#allocation11]
        %v607 = vld [vmem:[%s606] sm:$0x1]
        %v608 = vunpack.c.l.bf16 %v607
        %v609 = vsub.f32 %v608, %v598
        %v610 = vmul.f32 %v601, %v601
        %v611 = vmul.f32 %v605, %v605
        %v612 = vadd.f32 %v610, %v611
        %v613 = vmul.f32 %v609, %v609
        %v614 = vadd.f32 %v612, %v613
        %v615 = vrsqrt.pop %v614
        %v616 = vmul.f32 %v615, %v614
        %v617 = vmul.f32 %v616, %v615
        %v618 = vmul.f32 0.5, %v617
        %v619 = vsub.f32 1.5, %v618
        %v620 = vmul.f32 %v615, %v619
        %v621 = vmul.f32 %v614, %v620
        %vm622 = vcmp.eq.f32.partialorder %v614, inf
        %v623 = vsel %vm622, %v614, %v621
        %vm624 = vcmp.eq.f32.partialorder %v614, 0.0
        %v625 = vand.u32 %v614, 2147483648
        %v626 = vsel %vm624, %v625, %v623
        %v627 = vld [vmem:[%s533] sm:$0x1]
        %v628 = vunpack.c.l.bf16 %v627
        %v629 = vmul.f32 %v626, %v628
        %vm630 = vcmask 1041408
        %v631 = vsel %vm630, %v629, 0.0
        %632 = vadd.xlane.f32.xlu0 %v631
        %v633 = vpop.xlane.xlu0 %632
        %v634 = vrot.slane %v633, 4
        %v635 = vadd.f32 %v633, %v634
        %v636 = vrot.slane %v635, 2
        %v637 = vadd.f32 %v635, %v636
        %v638 = vrot.slane %v637, 1
        %v639 = vadd.f32 %v637, %v638
        %s640 = vtos %v639
        %v641 = vld [vmem:[%s441] sm:$0x1]
        %v642 = vunpack.c.l.bf16 %v641
        %s643 = scalar_lea.vmem %s441, 1 [#allocation9]
        %v644 = vld [vmem:[%s643] sm:$0x1]
        %v645 = vunpack.c.l.bf16 %v644
        %s646 = scalar_lea.vmem %s441, 2 [#allocation9]
        %v647 = vld [vmem:[%s646] sm:$0x1]
        %v648 = vunpack.c.l.bf16 %v647
        %v649 = vmul.f32 %v569, %v642
        %v650 = vmul.f32 %v571, %v645
        %v651 = vadd.f32 %v649, %v650
        %v652 = vmul.f32 %v574, %v648
        %v653 = vadd.f32 %v651, %v652
        %v654 = vadd.f32 %v653, %v577
        %v655 = vmul.f32 %v579, %v642
        %v656 = vmul.f32 %v581, %v645
        %v657 = vadd.f32 %v655, %v656
        %v658 = vmul.f32 %v584, %v648
        %v659 = vadd.f32 %v657, %v658
        %v660 = vadd.f32 %v659, %v587
        %v661 = vmul.f32 %v589, %v642
        %v662 = vmul.f32 %v591, %v645
        %v663 = vadd.f32 %v661, %v662
        %v664 = vmul.f32 %v594, %v648
        %v665 = vadd.f32 %v663, %v664
        %v666 = vadd.f32 %v665, %v597
        %v667 = vld [vmem:[%s461] sm:$0x1]
        %v668 = vunpack.c.l.bf16 %v667
        %v669 = vsub.f32 %v668, %v654
        %s670 = scalar_lea.vmem %s461, 1 [#allocation12]
        %v671 = vld [vmem:[%s670] sm:$0x1]
        %v672 = vunpack.c.l.bf16 %v671
        %v673 = vsub.f32 %v672, %v660
        %s674 = scalar_lea.vmem %s461, 2 [#allocation12]
        %v675 = vld [vmem:[%s674] sm:$0x1]
        %v676 = vunpack.c.l.bf16 %v675
        %v677 = vsub.f32 %v676, %v666
        %v678 = vmul.f32 %v669, %v669
        %v679 = vmul.f32 %v673, %v673
        %v680 = vadd.f32 %v678, %v679
        %v681 = vmul.f32 %v677, %v677
        %v682 = vadd.f32 %v680, %v681
        %v683 = vrsqrt.pop %v682
        %v684 = vmul.f32 %v683, %v682
        %v685 = vmul.f32 %v684, %v683
        %v686 = vmul.f32 0.5, %v685
        %v687 = vsub.f32 1.5, %v686
        %v688 = vmul.f32 %v683, %v687
        %v689 = vmul.f32 %v682, %v688
        %vm690 = vcmp.eq.f32.partialorder %v682, inf
        %v691 = vsel %vm690, %v682, %v689
        %vm692 = vcmp.eq.f32.partialorder %v682, 0.0
        %v693 = vand.u32 %v682, 2147483648
        %v694 = vsel %vm692, %v693, %v691
        %v695 = vld [vmem:[%s470] sm:$0x1]
        %v696 = vunpack.c.l.bf16 %v695
        %v697 = vmul.f32 %v694, %v696
        %v698 = vsel %vm630, %v697, 0.0
        %699 = vadd.xlane.f32.xlu0 %v698
        %v700 = vpop.xlane.xlu0 %699
        %v701 = vrot.slane %v700, 4
        %v702 = vadd.f32 %v700, %v701
        %v703 = vrot.slane %v702, 2
        %v704 = vadd.f32 %v702, %v703
        %v705 = vrot.slane %v704, 1
        %v706 = vadd.f32 %v704, %v705
        %s707 = vtos %v706
        %s708 = sadd.f32 %s640, %s707
        %p709 = scmp.eq.s32.totalorder %s48, 0
        // Predicated region
        $region73: #{tpu_custom_call.1} parent=47 // pred_check
          %p710 = pneg %p709
        $region74: #{tpu_custom_call.1} parent=47 // pred_check_branch
          %712 = sbr.rel (%p710) target = $region76
        $region75: #{tpu_custom_call.1} parent=47 // pred_region
          %vm713 = vcmask 0
          %714 = vst.msk [vmem:[%s536] sm:$0x1] %vm713, 0.0
        $region76: #{tpu_custom_call.1} parent=47 // pred_fallthru
          _
        %v715 = vld [vmem:[%s536] sm:$0x1]
        %v716 = vstv %s708
        %v717 = vadd.f32 %v715, %v716
        %vm718 = vcmask 0
        %719 = vst.msk [vmem:[%s536] sm:$0x1] %vm718, %v717
        %p720 = scmp.lt.s32.totalorder %s47, 5
        %s721 = scalar_select %p720, %s47, 5
        %s722 = scalar_lea.vmem %s9, %s721
        // Predicated region
        $region77: #{tpu_custom_call.1} parent=47 // pred_check
          %p723 = pneg %p266
        $region78: #{tpu_custom_call.1} parent=47 // pred_check_branch
          %725 = sbr.rel (%p723) target = $region80
        $region79: #{tpu_custom_call.1} parent=47 // pred_region
          _
        $region80: #{tpu_custom_call.1} parent=47 // pred_fallthru
          _
      $region48: #{tpu_custom_call.1} parent=5 // pred_fallthru
        _
      %p726 = scmp.le.s32.totalorder 2, %s38
      // Predicated region
      $region81: #{tpu_custom_call.1} parent=5 // pred_check
        %p727 = pneg %p726
      $region82: #{tpu_custom_call.1} parent=5 // pred_check_branch
        %729 = sbr.rel (%p727) target = $region84
      $region83: #{tpu_custom_call.1} parent=5 // pred_region
        %s730 = ssub.s32 %s38, 2
        // Predicated region
        $region85: #{tpu_custom_call.1} parent=83 // pred_check
          %p731 = pneg %p272
        $region86: #{tpu_custom_call.1} parent=83 // pred_check_branch
          %733 = sbr.rel (%p731) target = $region88
        $region87: #{tpu_custom_call.1} parent=83 // pred_region
          %p734 = scmp.lt.s32.totalorder %s49, 5
          %s735 = scalar_select %p734, %s49, 5
          %s736 = scalar_lea.vmem %s9, %s735
        $region88: #{tpu_custom_call.1} parent=83 // pred_fallthru
          _
      $region84: #{tpu_custom_call.1} parent=5 // pred_fallthru
        _
    $region6: #{tpu_custom_call.1} parent=1 // loop_footer
      %s42 = sadd.s32 1, %s38
    $region7: #{tpu_custom_call.1} parent=1 // loop_footer_branch
      %37 = sbr.rel target = $region3
    $region8: #{tpu_custom_call.1} parent=1 // loop_exit
      _
    %737 = vsyncpa [#allocation6], 1
    %s738 = scalar_lea.sflag [#allocation6], 1
    %739 = vsyncpa %s738, 1
    %740 = vsyncpa [#allocation10], 1
    %s741 = scalar_lea.sflag [#allocation10], 1
    %742 = vsyncpa %s741, 1
    %743 = vsyncpa [#allocation13], 1
    %s744 = scalar_lea.sflag [#allocation13], 1
    %745 = vsyncpa %s744, 1
    %746 = vsyncpa [#allocation7], 1
    %s747 = scalar_lea.sflag [#allocation7], 1
    %748 = vsyncpa %s747, 1

</llo_original>
